<compile_context>
chip_gen: v7x
topology: tpu7x:2x2x1
jax: 0.10.0
libtpu: 0.0.40
codegen_flags: <defaults>
</compile_context>

<pallas_src>
import functools

import jax
import jax.numpy as jnp
from jax.experimental import pallas as pl
from jax.experimental.pallas import tpu as pltpu


def trainer_q_kernel(a_ref, w_ref, tr_ref, out_ref, *, d_valid):
    """Fused Trainer_Q forward math, whole (toy) batch in one grid step.

    Block shapes (all blocks == full arrays):
      a_ref  : (B, 2H, T) f32  [x_next ; x_prev] slices, hidden on sublanes, time on lanes
      w_ref  : (B, 2H, T) f32  [W_train[:, tok] ; -W_ref[:, tok]], zero lanes for t >= D
      tr_ref : (B, T)     f32  true_reward (precomputed in the wrapper)
      out_ref: (B, OUT_W) f32  packed: [loss | predict (T) | true_reward (T) | 0-pad]
    """
    B, _, T = a_ref.shape

    # predict_dist[b, t] = <x_next, W_train[:, tok]> - <x_prev, W_ref[:, tok]>
    # as one fused multiply + one sublane reduction over 2H.
    contrib = a_ref[...] * w_ref[...]                       # (B, 2H, T)  VPU
    pred = jnp.sum(contrib, axis=1)                         # (B, T)      sublane reduce

    tr = tr_ref[...]                                        # (B, T)

    # if word_id >= dist.size(0): predict[word_id] = true_reward[word_id]
    t_idx = jax.lax.broadcasted_iota(jnp.int32, (B, T), 1)
    predict = jnp.where(t_idx < d_valid, pred, tr)

    diff = predict - tr
    loss = jnp.mean(diff * diff, axis=-1, keepdims=True)    # (B, 1) per-sample MSE

    # Single lane-dense packed output slab.
    out_ref[...] = jnp.zeros_like(out_ref)
    out_ref[:, 0:1] = loss
    out_ref[:, 1:1 + T] = predict
    out_ref[:, 1 + T:1 + 2 * T] = tr


def trainer_q_forward(inner_seq_first, w_ref, w_train, sample_tokens, sample_rewards):
    """Pallas implementation of the tensor math in Trainer_Q.forward.

    inner_seq_first : (L, B, H) f32  activations, seq-first (as handed to the torch code)
    w_ref / w_train : (H, V) linear "ref_model" / "train_model" vocab projections
    sample_tokens   : (B, S) int32 sampled token ids, S = T + 2
    sample_rewards  : (B, T + 1) f32 per-prefix rewards (BLEU stand-in)
    Returns (loss (B,), predict (B, T), true_reward (B, T)).
    """
    inner = inner_seq_first.astype(jnp.float32)            # (L, B, H) kept seq-first
    L, B, H = inner.shape
    T = sample_rewards.shape[1] - 1                        # == true_reward.size(0)
    D = min(L - 1, T)                                      # dist rows actually used

    # Activations: only the two D-row slices, relaid to (B, 2H, D) time-on-lanes.
    x_next = jnp.transpose(inner[1:D + 1], (1, 2, 0))      # (B, H, D)
    x_prev = jnp.transpose(inner[:D], (1, 2, 0))           # (B, H, D)
    a = jnp.concatenate([x_next, x_prev], axis=1)          # (B, 2H, D)

    # Per-token weight columns: direct axis-1 gather (no (V, H) transpose of W),
    # transpose only the small gathered result.  Ref columns carry the minus sign.
    tok = sample_tokens[:, :D].astype(jnp.int32)                                        # (B, D)
    wt = jnp.transpose(jnp.take(w_train.astype(jnp.float32), tok, axis=1), (1, 0, 2))   # (B, H, D)
    wr = jnp.transpose(jnp.take(w_ref.astype(jnp.float32), tok, axis=1), (1, 0, 2))     # (B, H, D)
    w_fused = jnp.concatenate([wt, -wr], axis=1)                                        # (B, 2H, D)

    if T > D:                                              # lane-pad time axis D -> T (zeros)
        pad = ((0, 0), (0, 0), (0, T - D))
        a = jnp.pad(a, pad)
        w_fused = jnp.pad(w_fused, pad)

    # true_reward[t] = rewards[t + 1] - rewards[t], precomputed lane-dense.
    tr = (sample_rewards[:, 1:] - sample_rewards[:, :-1]).astype(jnp.float32)           # (B, T)

    out_w = max(128, ((1 + 2 * T + 127) // 128) * 128)

    grid_spec = pltpu.PrefetchScalarGridSpec(
        num_scalar_prefetch=0,
        grid=(1,),
        in_specs=[
            pl.BlockSpec((B, 2 * H, T), lambda i: (0, 0, 0)),
            pl.BlockSpec((B, 2 * H, T), lambda i: (0, 0, 0)),
            pl.BlockSpec((B, T), lambda i: (0, 0)),
        ],
        out_specs=pl.BlockSpec((B, out_w), lambda i: (0, 0)),
    )
    packed = pl.pallas_call(
        functools.partial(trainer_q_kernel, d_valid=D),
        out_shape=jax.ShapeDtypeStruct((B, out_w), jnp.float32),
        grid_spec=grid_spec,
        compiler_params=pltpu.CompilerParams(dimension_semantics=("arbitrary",)),
    )(a, w_fused, tr)

    loss = packed[:, 0]
    predict = packed[:, 1:1 + T]
    true_reward = packed[:, 1 + T:1 + 2 * T]
    return loss, predict, true_reward


def reference_forward(inner_seq_first, w_ref, w_train, sample_tokens, sample_rewards):
    """Pure-JAX reference mirroring the PyTorch per-sample loop (full matmul + gather)."""
    inner = jnp.transpose(inner_seq_first, (1, 0, 2))      # (B, L, H)
    B, L, _ = inner.shape
    T = sample_rewards.shape[1] - 1
    D = L - 1
    hi = jax.lax.Precision.HIGHEST
    losses, preds, trs = [], [], []
    for b in range(B):
        logits_ref = jnp.dot(inner[b], w_ref, precision=hi)
        logits_train = jnp.dot(inner[b], w_train, precision=hi)
        dist = logits_train[1:] - logits_ref[:-1]           # (D, V)
        r = sample_rewards[b]
        tr = r[1:] - r[:-1]                                  # (T,)
        pred = []
        for t in range(T):
            if t < D:
                pred.append(dist[t, sample_tokens[b, t]])
            else:
                pred.append(tr[t])
        pred = jnp.stack(pred)
        losses.append(jnp.mean((pred - tr) ** 2))
        preds.append(pred)
        trs.append(tr)
    return jnp.stack(losses), jnp.stack(preds), jnp.stack(trs)


if __name__ == "__main__":
    key = jax.random.PRNGKey(0)
    B, L, H, V = 2, 8, 32, 128
    S = 11                     # sampled sequence length -> T = S - 2 = 9 (> L-1, hits both branches)
    T = S - 2
    EOS_ID = 2

    k1, k2, k3, k4, k5 = jax.random.split(key, 5)
    inner_batch = jax.random.normal(k1, (L, B, H), dtype=jnp.float32)      # seq-first, like torch input
    w_ref = 0.1 * jax.random.normal(k2, (H, V), dtype=jnp.float32)
    w_train = 0.1 * jax.random.normal(k3, (H, V), dtype=jnp.float32)
    sample_tokens = jax.random.randint(k4, (B, S), 0, V, dtype=jnp.int32)

    # all_sample prefix matrix (rows = token prefixes padded with eos); in the torch
    # code it only feeds the BLEU scorer, reproduced here as plain-JAX glue.
    tri = jnp.tril(jnp.ones((S - 1, S - 1), jnp.int32))
    all_sample = jnp.where(tri == 1, sample_tokens[:, None, : S - 1], EOS_ID)  # (B, S-1, S-1)
    del all_sample

    # TODO(synk): BLEU (sacrebleu) over detokenized strings cannot run on TPU; use
    # deterministic synthetic per-prefix rewards with the same shape instead.
    sample_rewards = jax.random.uniform(k5, (B, S - 1), dtype=jnp.float32)     # (B, T + 1)

    loss, predict, true_reward = trainer_q_forward(
        inner_batch, w_ref, w_train, sample_tokens, sample_rewards)
    jax.block_until_ready((loss, predict, true_reward))

    ref_loss, ref_pred, ref_tr = reference_forward(
        inner_batch, w_ref, w_train, sample_tokens, sample_rewards)

    assert jnp.allclose(loss, ref_loss, rtol=1e-5, atol=1e-5)
    assert jnp.allclose(predict, ref_pred, rtol=1e-5, atol=1e-5)
    assert jnp.allclose(true_reward, ref_tr, rtol=1e-5, atol=1e-5)
    print("KERNEL_OK")
</pallas_src>

<mosaic_0001>
module attributes {stable_mosaic.version = 11 : i64} {
  func.func @trainer_q_kernel(%arg0: i32, %arg1: memref<2x64x9xf32, #tpu.memory_space<vmem>>, %arg2: memref<2x64x9xf32, #tpu.memory_space<vmem>>, %arg3: memref<2x9xf32, #tpu.memory_space<vmem>>, %arg4: memref<2x128xf32, #tpu.memory_space<vmem>>) attributes {dimension_semantics = [#tpu.dimension_semantics<arbitrary>], iteration_bounds = array<i64: 1>, scalar_prefetch = 0 : i64, scratch_operands = 0 : i64, tpu.core_type = #tpu.core_type<tc>, window_params = [{pipeline_mode = #tpu.pipeline_mode<synchronous>, transform_indices = @transform_0, window_bounds = array<i64: 2, 64, 9>}, {pipeline_mode = #tpu.pipeline_mode<synchronous>, transform_indices = @transform_1, window_bounds = array<i64: 2, 64, 9>}, {pipeline_mode = #tpu.pipeline_mode<synchronous>, transform_indices = @transform_2, window_bounds = array<i64: 2, 9>}, {pipeline_mode = #tpu.pipeline_mode<synchronous>, transform_indices = @transform_3, window_bounds = array<i64: 2, 128>}]} {
    %c0 = arith.constant 0 : index
    %c0_0 = arith.constant 0 : index
    %c0_1 = arith.constant 0 : index
    %0 = vector.load %arg1[%c0, %c0_0, %c0_1] : memref<2x64x9xf32, #tpu.memory_space<vmem>>, vector<2x64x9xf32>
    %c0_2 = arith.constant 0 : index
    %c0_3 = arith.constant 0 : index
    %c0_4 = arith.constant 0 : index
    %1 = vector.load %arg2[%c0_2, %c0_3, %c0_4] : memref<2x64x9xf32, #tpu.memory_space<vmem>>, vector<2x64x9xf32>
    %2 = arith.mulf %0, %1 : vector<2x64x9xf32>
    %cst = arith.constant dense<0.000000e+00> : vector<2x9xf32>
    %3 = vector.multi_reduction <add>, %2, %cst [1] : vector<2x64x9xf32> to vector<2x9xf32>
    %c0_5 = arith.constant 0 : index
    %c0_6 = arith.constant 0 : index
    %4 = vector.load %arg3[%c0_5, %c0_6] : memref<2x9xf32, #tpu.memory_space<vmem>>, vector<2x9xf32>
    %5 = tpu.iota {dimensions = array<i32: 1>} : vector<2x9xi32>
    %c7_i32 = arith.constant 7 : i32
    %6 = vector.broadcast %c7_i32 : i32 to vector<2x9xi32>
    %7 = arith.cmpi slt, %5, %6 : vector<2x9xi32>
    %8 = arith.select %7, %3, %4 : vector<2x9xi1>, vector<2x9xf32>
    %9 = arith.subf %8, %4 : vector<2x9xf32>
    %10 = arith.mulf %9, %9 : vector<2x9xf32>
    %cst_7 = arith.constant dense<0.000000e+00> : vector<2xf32>
    %11 = vector.multi_reduction <add>, %10, %cst_7 [1] : vector<2x9xf32> to vector<2xf32>
    %12 = vector.shape_cast %11 : vector<2xf32> to vector<2x1xf32>
    %cst_8 = arith.constant 9.000000e+00 : f32
    %13 = vector.broadcast %cst_8 : f32 to vector<2x1xf32>
    %14 = arith.divf %12, %13 : vector<2x1xf32>
    %cst_9 = arith.constant 0.000000e+00 : f32
    %15 = vector.broadcast %cst_9 : f32 to vector<2x128xf32>
    %c0_10 = arith.constant 0 : index
    %c0_11 = arith.constant 0 : index
    %16 = vector.load %arg4[%c0_10, %c0_11] : memref<2x128xf32, #tpu.memory_space<vmem>>, vector<2x128xf32>
    tpu.vector_store %arg4[%c0_10, %c0_11], %15 {strides = array<i32>} : memref<2x128xf32, #tpu.memory_space<vmem>>, vector<2x128xf32>,
    %c0_12 = arith.constant 0 : index
    %c0_13 = arith.constant 0 : index
    %17 = vector.load %arg4[%c0_12, %c0_13] : memref<2x128xf32, #tpu.memory_space<vmem>>, vector<2x1xf32>
    tpu.vector_store %arg4[%c0_12, %c0_13], %14 {strides = array<i32>} : memref<2x128xf32, #tpu.memory_space<vmem>>, vector<2x1xf32>,
    %c0_14 = arith.constant 0 : index
    %c1 = arith.constant 1 : index
    %18 = vector.load %arg4[%c0_14, %c1] : memref<2x128xf32, #tpu.memory_space<vmem>>, vector<2x9xf32>
    tpu.vector_store %arg4[%c0_14, %c1], %8 {strides = array<i32>} : memref<2x128xf32, #tpu.memory_space<vmem>>, vector<2x9xf32>,
    %c0_15 = arith.constant 0 : index
    %c10 = arith.constant 10 : index
    %19 = vector.load %arg4[%c0_15, %c10] : memref<2x128xf32, #tpu.memory_space<vmem>>, vector<2x9xf32>
    tpu.vector_store %arg4[%c0_15, %c10], %4 {strides = array<i32>} : memref<2x128xf32, #tpu.memory_space<vmem>>, vector<2x9xf32>,
    return
  }
  func.func @transform_0(%arg0: i32) -> (i32, i32, i32) {
    %c0_i32 = arith.constant 0 : i32
    %c0_i32_0 = arith.constant 0 : i32
    %c0_i32_1 = arith.constant 0 : i32
    %c0_i32_2 = arith.constant 0 : i32
    return %c0_i32, %c0_i32_0, %c0_i32_1 : i32, i32, i32
  }
  func.func @transform_1(%arg0: i32) -> (i32, i32, i32) {
    %c0_i32 = arith.constant 0 : i32
    %c0_i32_0 = arith.constant 0 : i32
    %c0_i32_1 = arith.constant 0 : i32
    %c0_i32_2 = arith.constant 0 : i32
    return %c0_i32, %c0_i32_0, %c0_i32_1 : i32, i32, i32
  }
  func.func @transform_2(%arg0: i32) -> (i32, i32) {
    %c0_i32 = arith.constant 0 : i32
    %c0_i32_0 = arith.constant 0 : i32
    %c0_i32_1 = arith.constant 0 : i32
    return %c0_i32, %c0_i32_0 : i32, i32
  }
  func.func @transform_3(%arg0: i32) -> (i32, i32) {
    %c0_i32 = arith.constant 0 : i32
    %c0_i32_0 = arith.constant 0 : i32
    %c0_i32_1 = arith.constant 0 : i32
    return %c0_i32, %c0_i32_0 : i32, i32
  }
}

</mosaic_0001>

<llo_original>
// kernel: tpu_custom_call.1
$region0: #{tpu_custom_call.1}
  #allocation0 [shape = 'u32[]', space=smem, size = 0x4, offset = 0x4, fixed_abs, tag = 'smem constant byte address 0x4 - core index']
  #allocation1 [shape = 'u32[144,128]{1,0:T(1,128)}', space=vmem, size = 0x12000, scoped, tag = 'internal scratch']
  %s0 = inlined_call_operand.vmem [shape: f32[2,64,9], index: 0, kind: input, shape index: {}]
  %s1 = inlined_call_operand.vmem [shape: f32[2,64,9], index: 1, kind: input, shape index: {}]
  %s2 = inlined_call_operand.vmem [shape: f32[2,9], index: 2, kind: input, shape index: {}]
  %s3 = inlined_call_operand.hbm [shape: f32[2,128], index: 3, kind: output, shape index: {}]
  %s4 = sld [smem:[#allocation0]]
  $region22: #{tpu_custom_call.1} parent=0
    _
  %s6 = ssub.s32 1, %s4
  %s7 = scalar_select 0, %s6, %s4
  $region1: #{tpu_custom_call.1} parent=0
    #allocation2 [shape = 'u8[1024]{0}', space=vmem, size = 0x400, scoped, tag = 'output window, operand 0, single buffered']
    #allocation3 [shape = 's32[1]{0}', space=sflag, size = 0x4, scoped, tag = 'scoped memory for tpu_custom_call.1']
    %8 = vsyncpa [#allocation3], 0
    // Predicated region
    $region2: #{tpu_custom_call.1} parent=1 // pred_check
      _
    $region3: #{tpu_custom_call.1} parent=1 // pred_check_branch
      %10 = sbr.rel (0) target = $region5
    $region4: #{tpu_custom_call.1} parent=1 // pred_region
      _
    $region5: #{tpu_custom_call.1} parent=1 // pred_fallthru
      _
    // Predicated region
    $region6: #{tpu_custom_call.1} parent=1 // pred_check
      _
    $region7: #{tpu_custom_call.1} parent=1 // pred_check_branch
      %12 = sbr.rel (0) target = $region9
    $region8: #{tpu_custom_call.1} parent=1 // pred_region
      _
    $region9: #{tpu_custom_call.1} parent=1 // pred_fallthru
      _
    // Predicated region
    $region10: #{tpu_custom_call.1} parent=1 // pred_check
      _
    $region11: #{tpu_custom_call.1} parent=1 // pred_check_branch
      %14 = sbr.rel (0) target = $region13
    $region12: #{tpu_custom_call.1} parent=1 // pred_region
      _
    $region13: #{tpu_custom_call.1} parent=1 // pred_fallthru
      _
    %v15 = vld [vmem:[%s0] sm:$0xff]
    %v16 = vld [vmem:[%s0 + $0x8] sm:$0xff]
    %v17 = vld [vmem:[%s0 + $0x10] sm:$0xff]
    %v18 = vld [vmem:[%s0 + $0x18] sm:$0xff]
    %v19 = vld [vmem:[%s0 + $0x20] sm:$0xff]
    %v20 = vld [vmem:[%s0 + $0x28] sm:$0xff]
    %v21 = vld [vmem:[%s0 + $0x30] sm:$0xff]
    %v22 = vld [vmem:[%s0 + $0x38] sm:$0xff]
    %v23 = vld [vmem:[%s0 + $0x40] sm:$0xff]
    %v24 = vld [vmem:[%s0 + $0x48] sm:$0xff]
    %v25 = vld [vmem:[%s0 + $0x50] sm:$0xff]
    %v26 = vld [vmem:[%s0 + $0x58] sm:$0xff]
    %v27 = vld [vmem:[%s0 + $0x60] sm:$0xff]
    %v28 = vld [vmem:[%s0 + $0x68] sm:$0xff]
    %v29 = vld [vmem:[%s0 + $0x70] sm:$0xff]
    %v30 = vld [vmem:[%s0 + $0x78] sm:$0xff]
    %v31 = vld [vmem:[%s1] sm:$0xff]
    %v32 = vld [vmem:[%s1 + $0x8] sm:$0xff]
    %v33 = vld [vmem:[%s1 + $0x10] sm:$0xff]
    %v34 = vld [vmem:[%s1 + $0x18] sm:$0xff]
    %v35 = vld [vmem:[%s1 + $0x20] sm:$0xff]
    %v36 = vld [vmem:[%s1 + $0x28] sm:$0xff]
    %v37 = vld [vmem:[%s1 + $0x30] sm:$0xff]
    %v38 = vld [vmem:[%s1 + $0x38] sm:$0xff]
    %v39 = vld [vmem:[%s1 + $0x40] sm:$0xff]
    %v40 = vld [vmem:[%s1 + $0x48] sm:$0xff]
    %v41 = vld [vmem:[%s1 + $0x50] sm:$0xff]
    %v42 = vld [vmem:[%s1 + $0x58] sm:$0xff]
    %v43 = vld [vmem:[%s1 + $0x60] sm:$0xff]
    %v44 = vld [vmem:[%s1 + $0x68] sm:$0xff]
    %v45 = vld [vmem:[%s1 + $0x70] sm:$0xff]
    %v46 = vld [vmem:[%s1 + $0x78] sm:$0xff]
    %v47 = vmul.f32 %v15, %v31
    %v48 = vmul.f32 %v16, %v32
    %v49 = vmul.f32 %v17, %v33
    %v50 = vmul.f32 %v18, %v34
    %v51 = vmul.f32 %v19, %v35
    %v52 = vmul.f32 %v20, %v36
    %v53 = vmul.f32 %v21, %v37
    %v54 = vmul.f32 %v22, %v38
    %v55 = vmul.f32 %v23, %v39
    %v56 = vmul.f32 %v24, %v40
    %v57 = vmul.f32 %v25, %v41
    %v58 = vmul.f32 %v26, %v42
    %v59 = vmul.f32 %v27, %v43
    %v60 = vmul.f32 %v28, %v44
    %v61 = vmul.f32 %v29, %v45
    %v62 = vmul.f32 %v30, %v46
    %vm63 = vcmask 72704
    %v64 = vsel %vm63, %v47, 0.0
    %v65 = vsel %vm63, %v48, 0.0
    %v66 = vadd.f32 %v64, %v65
    %v67 = vsel %vm63, %v49, 0.0
    %v68 = vadd.f32 %v66, %v67
    %v69 = vsel %vm63, %v50, 0.0
    %v70 = vadd.f32 %v68, %v69
    %v71 = vsel %vm63, %v51, 0.0
    %v72 = vadd.f32 %v70, %v71
    %v73 = vsel %vm63, %v52, 0.0
    %v74 = vadd.f32 %v72, %v73
    %v75 = vsel %vm63, %v53, 0.0
    %v76 = vadd.f32 %v74, %v75
    %v77 = vsel %vm63, %v54, 0.0
    %v78 = vadd.f32 %v76, %v77
    %v79 = vrot.slane %v78, 4
    %v80 = vadd.f32 %v78, %v79
    %v81 = vrot.slane %v80, 2
    %v82 = vadd.f32 %v80, %v81
    %v83 = vrot.slane %v82, 1
    %v84 = vadd.f32 %v82, %v83
    %v85 = vsel %vm63, %v55, 0.0
    %v86 = vsel %vm63, %v56, 0.0
    %v87 = vadd.f32 %v85, %v86
    %v88 = vsel %vm63, %v57, 0.0
    %v89 = vadd.f32 %v87, %v88
    %v90 = vsel %vm63, %v58, 0.0
    %v91 = vadd.f32 %v89, %v90
    %v92 = vsel %vm63, %v59, 0.0
    %v93 = vadd.f32 %v91, %v92
    %v94 = vsel %vm63, %v60, 0.0
    %v95 = vadd.f32 %v93, %v94
    %v96 = vsel %vm63, %v61, 0.0
    %v97 = vadd.f32 %v95, %v96
    %v98 = vsel %vm63, %v62, 0.0
    %v99 = vadd.f32 %v97, %v98
    %v100 = vrot.slane %v99, 4
    %v101 = vadd.f32 %v99, %v100
    %v102 = vrot.slane %v101, 2
    %v103 = vadd.f32 %v101, %v102
    %v104 = vrot.slane %v103, 1
    %v105 = vadd.f32 %v103, %v104
    %v106 = vld [vmem:[%s2] sm:$0x3]
    %v107 = vlaneseq
    %v108 = vand.u32 %v107, 127
    %vm109 = vcmp.lt.s32.totalorder %v108, 7
    %vm112 = vcmask 1041409
    %v113 = vsel %vm112, %v105, %v84
    %v115 = vsel %vm109, %v113, %v106
    %v116 = vsub.f32 %v115, %v106
    %v117 = vmul.f32 %v116, %v116
    %vm118 = vcmask 66560
    %v119 = vsel %vm118, %v117, 0.0
    %120 = vadd.xlane.f32.xlu0 %v119
    %v121 = vpop.xlane.xlu0 %120
    %v122 = vrcp.pop 9.0
    %v123 = vmul.f32 %v121, %v122
    %124 = vst [vmem:[#allocation2] sm:$0x3] 0.0
    %vm125 = vcmask 1024
    %126 = vst.msk [vmem:[#allocation2] sm:$0x3] %vm125, %v123
    %128 = vrot.lane.b32.xlu0 %v115, 1
    %v129 = vpop.permute.xlu0 %128
    %vm131 = vcmask 74760
    %132 = vst.msk [vmem:[#allocation2] sm:$0x3] %vm131, %v129
    %134 = vrot.lane.b32.xlu0 %v106, 10
    %v135 = vpop.permute.xlu0 %134
    %vm137 = vcmask 148560
    %138 = vst.msk [vmem:[#allocation2] sm:$0x3] %vm137, %v135
    // Predicated region
    $region14: #{tpu_custom_call.1} parent=1 // pred_check
      _
    $region15: #{tpu_custom_call.1} parent=1 // pred_check_branch
      %140 = sbr.rel (0) target = $region17
    $region16: #{tpu_custom_call.1} parent=1 // pred_region
      %s142 = ssub.s32 32, 32
      %143 = vsyncadd [#allocation3], %s142
      %s145 = sshll.u32 [#allocation2], 4
      %s146 = int_to_ptr.vmem [resolvable:$true] %s145
      %148 = dma.vmem_to_hbm [thread:$0]  %s146, 32, %s3, [#allocation3]
    $region17: #{tpu_custom_call.1} parent=1 // pred_fallthru
      _
    // Predicated region
    $region18: #{tpu_custom_call.1} parent=1 // pred_check
      _
    $region19: #{tpu_custom_call.1} parent=1 // pred_check_branch
      %150 = sbr.rel (0) target = $region21
    $region20: #{tpu_custom_call.1} parent=1 // pred_region
      %151 = dma.done [#allocation3], 32
    $region21: #{tpu_custom_call.1} parent=1 // pred_fallthru
      _
    %152 = vsyncpa [#allocation3], 1

</llo_original>
